<compile_context>
chip_gen: v6e
topology: v6e:2x2x1
jax: 0.10.0
libtpu: 0.0.40
codegen_flags: <defaults>
</compile_context>

<pallas_src>
import functools

import jax
import jax.numpy as jnp
from jax.experimental import pallas as pl
from jax.experimental.pallas import tpu as pltpu

LOG_STD_MIN = -20.0
LOG_STD_MAX = 2.0
LANE = 128
BF16_SUBLANE = 16  # bf16 min tile is (16, 128)


def _round_up(x, m):
    return ((x + m - 1) // m) * m


def _cdiv(a, b):
    return (a + b - 1) // b


# --------------------------------------------------------------------------- #
# Kernel
# --------------------------------------------------------------------------- #
def gaussian_policy_kernel(
    x_ref,                      # (TB, S_pad) bf16 streaming activations
    w1_ref, b1_ref,
    w2_ref, b2_ref,
    w3_ref, b3_ref,
    wh_ref, bh_ref,             # fused [mean | log_std | zero-pad] head
    lo_ref, hi_ref,             # (1, NH) per-column clamp bounds
    head_ref,                   # (TB, NH) bf16 lane-dense output
):
    # fc1 + ReLU  (bf16 MXU operands, f32 accumulation + elementwise)
    h = jnp.dot(x_ref[...], w1_ref[...],
                preferred_element_type=jnp.float32) + b1_ref[...]
    h = jnp.maximum(h, 0.0)

    # fc2 + ReLU
    h = jnp.dot(h.astype(jnp.bfloat16), w2_ref[...],
                preferred_element_type=jnp.float32) + b2_ref[...]
    h = jnp.maximum(h, 0.0)

    # fc3 + ReLU
    h = jnp.dot(h.astype(jnp.bfloat16), w3_ref[...],
                preferred_element_type=jnp.float32) + b3_ref[...]
    h = jnp.maximum(h, 0.0)

    # Fused heads: one lane-dense matmul producing [mean | log_std | pad].
    head = jnp.dot(h.astype(jnp.bfloat16), wh_ref[...],
                   preferred_element_type=jnp.float32) + bh_ref[...]

    # Per-column clamp: mean columns (-inf, +inf) pass through, log_std columns
    # are clipped to [-20, 2], pad columns stay 0.  Pure VPU, no iota/select.
    head = jnp.minimum(jnp.maximum(head, lo_ref[...]), hi_ref[...])

    head_ref[...] = head.astype(head_ref.dtype)


# --------------------------------------------------------------------------- #
# Parameter packing (done once, offline)
# --------------------------------------------------------------------------- #
def prepare_params(params):
    """Pack raw f32 params: bf16 weights, lane-padded dims, fused padded head."""
    S, H = params["w1"].shape
    A = params["wm"].shape[1]
    S_pad = _round_up(S, LANE)
    H_pad = _round_up(H, LANE)
    NH = max(LANE, _round_up(2 * A, LANE))

    def pad2(a, rows, cols):
        return jnp.pad(a, ((0, rows - a.shape[0]), (0, cols - a.shape[1])))

    wh = jnp.concatenate([params["wm"], params["wls"]], axis=1)   # (H, 2A)
    bh = jnp.concatenate([params["bm"], params["bls"]], axis=1)   # (1, 2A)
    lo = jnp.concatenate([jnp.full((1, A), -jnp.inf, jnp.float32),
                          jnp.full((1, A), LOG_STD_MIN, jnp.float32)], axis=1)
    hi = jnp.concatenate([jnp.full((1, A), jnp.inf, jnp.float32),
                          jnp.full((1, A), LOG_STD_MAX, jnp.float32)], axis=1)

    return {
        "w1": pad2(params["w1"], S_pad, H_pad).astype(jnp.bfloat16),
        "b1": pad2(params["b1"], 1, H_pad).astype(jnp.float32),
        "w2": pad2(params["w2"], H_pad, H_pad).astype(jnp.bfloat16),
        "b2": pad2(params["b2"], 1, H_pad).astype(jnp.float32),
        "w3": pad2(params["w3"], H_pad, H_pad).astype(jnp.bfloat16),
        "b3": pad2(params["b3"], 1, H_pad).astype(jnp.float32),
        "wh": pad2(wh, H_pad, NH).astype(jnp.bfloat16),
        "bh": pad2(bh, 1, NH).astype(jnp.float32),
        "lo": pad2(lo, 1, NH).astype(jnp.float32),
        "hi": pad2(hi, 1, NH).astype(jnp.float32),
    }


# --------------------------------------------------------------------------- #
# Tile selection
# --------------------------------------------------------------------------- #
def _choose_tb(B):
    """Batch tile: <=512 rows, minimal padding, multiple of 16 (bf16 sublanes),
    and >=2 grid steps when B > 16 so the 'parallel' axis feeds both v7x TCs."""
    if B <= BF16_SUBLANE:
        return BF16_SUBLANE
    n_steps = max(2, _cdiv(B, 512))
    return _round_up(_cdiv(B, n_steps), BF16_SUBLANE)


def _cap_tb_for_vmem(tb, s_pad, h_pad, nh, weight_bytes,
                     budget=12 * 1024 * 1024):
    """Keep (double-buffered streams + resident weights + f32 intermediates)
    comfortably inside the default scoped-VMEM limits (v7x: 64 MiB physical)."""
    def need(t):
        stream = 2 * t * s_pad * 2 + 2 * t * nh * 2      # bf16 in/out, 2 buffers
        interm = 4 * t * h_pad * 4                        # f32 hidden activations
        return 2 * weight_bytes + stream + interm         # weights counted x2 (conservative)
    while tb > BF16_SUBLANE and need(tb) > budget:
        tb -= BF16_SUBLANE
    return max(tb, BF16_SUBLANE)


# --------------------------------------------------------------------------- #
# Forward wrapper
# --------------------------------------------------------------------------- #
@functools.partial(jax.jit, static_argnames=("action_dim",))
def gaussian_policy_forward(state, packed, action_dim):
    """GaussianPolicy.forward: returns (mean, log_std), each [B, action_dim] f32."""
    B, S = state.shape
    S_pad, H_pad = packed["w1"].shape
    NH = packed["wh"].shape[1]

    weight_bytes = sum(int(v.size) * v.dtype.itemsize for v in packed.values())
    TB = _cap_tb_for_vmem(_choose_tb(B), S_pad, H_pad, NH, weight_bytes)
    Bp = _round_up(B, TB)
    grid = (Bp // TB,)

    # Pad batch/features and cast to bf16 in one fused XLA pass: x is only ever
    # an MXU operand, so this halves the streaming-input DMA with no numeric change.
    x = jnp.pad(state, ((0, Bp - B), (0, S_pad - S))).astype(jnp.bfloat16)

    # Weights/biases: full-array blocks with constant index maps -> VMEM-resident
    # across all batch-grid steps.  (Single-buffering them explicitly is possible
    # via pipeline_mode, but at these sizes the default already fits.)
    def const_spec(a):
        return pl.BlockSpec(a.shape, lambda i: (0, 0))

    flops = 2 * Bp * (S_pad * H_pad + 2 * H_pad * H_pad + H_pad * NH)
    bytes_accessed = int(x.size) * 2 + weight_bytes + Bp * NH * 2

    cp_kwargs = dict(dimension_semantics=("parallel",))
    vmem_need = (2 * weight_bytes + 2 * TB * S_pad * 2 + 2 * TB * NH * 2
                 + 4 * TB * H_pad * 4)
    if vmem_need > 14 * 1024 * 1024:  # only raise the scoped limit when needed
        cp_kwargs["vmem_limit_bytes"] = min(int(vmem_need * 3 // 2),
                                            96 * 1024 * 1024)

    head = pl.pallas_call(
        gaussian_policy_kernel,
        out_shape=jax.ShapeDtypeStruct((Bp, NH), jnp.bfloat16),
        grid=grid,
        in_specs=[
            pl.BlockSpec((TB, S_pad), lambda i: (i, 0)),     # batch-tiled activations
            const_spec(packed["w1"]), const_spec(packed["b1"]),
            const_spec(packed["w2"]), const_spec(packed["b2"]),
            const_spec(packed["w3"]), const_spec(packed["b3"]),
            const_spec(packed["wh"]), const_spec(packed["bh"]),
            const_spec(packed["lo"]), const_spec(packed["hi"]),
        ],
        out_specs=pl.BlockSpec((TB, NH), lambda i: (i, 0)),  # lane-dense bf16 output
        compiler_params=pltpu.CompilerParams(**cp_kwargs),
        cost_estimate=pl.CostEstimate(
            flops=flops, transcendentals=0, bytes_accessed=bytes_accessed),
    )(x, packed["w1"], packed["b1"], packed["w2"], packed["b2"],
      packed["w3"], packed["b3"], packed["wh"], packed["bh"],
      packed["lo"], packed["hi"])

    head = head.astype(jnp.float32)
    mean = head[:B, :action_dim]
    log_std = head[:B, action_dim:2 * action_dim]
    return mean, log_std


# --------------------------------------------------------------------------- #
# Init + self-test
# --------------------------------------------------------------------------- #
def _orthogonal(key, shape, gain=1.0):
    """Deterministic orthogonal init (mimics torch.nn.init.orthogonal_)."""
    rows, cols = shape
    n = max(rows, cols)
    a = jax.random.normal(key, (n, n), dtype=jnp.float32)
    q, r = jnp.linalg.qr(a)
    q = q * jnp.sign(jnp.diag(r))[None, :]
    return gain * q[:rows, :cols]


def init_params(key, state_dim, action_dim, hidden_dim):
    keys = jax.random.split(key, 5)
    return {
        "w1": _orthogonal(keys[0], (state_dim, hidden_dim)),
        "b1": jnp.zeros((1, hidden_dim), jnp.float32),
        "w2": _orthogonal(keys[1], (hidden_dim, hidden_dim)),
        "b2": jnp.zeros((1, hidden_dim), jnp.float32),
        "w3": _orthogonal(keys[2], (hidden_dim, hidden_dim)),
        "b3": jnp.zeros((1, hidden_dim), jnp.float32),
        "wm": _orthogonal(keys[3], (hidden_dim, action_dim)),
        "bm": jnp.zeros((1, action_dim), jnp.float32),
        "wls": _orthogonal(keys[4], (hidden_dim, action_dim)),
        "bls": jnp.zeros((1, action_dim), jnp.float32),
    }


if __name__ == "__main__":
    batch = 4
    state_dim = 16
    action_dim = 8
    hidden_dim = 32

    key = jax.random.PRNGKey(0)
    pkey, skey = jax.random.split(key)

    params = init_params(pkey, state_dim, action_dim, hidden_dim)
    packed = prepare_params(params)
    state = jax.random.normal(skey, (batch, state_dim), dtype=jnp.float32)

    mean, log_std = gaussian_policy_forward(state, packed, action_dim)
    jax.block_until_ready((mean, log_std))

    # Reference 1: mimics the kernel's bf16-matmul / f32-accumulate / bf16-out math.
    def ref_bf16(x, p):
        def lin(h, w, b):
            return jnp.dot(h.astype(jnp.bfloat16), w.astype(jnp.bfloat16),
                           preferred_element_type=jnp.float32) + b
        h = jnp.maximum(lin(x, p["w1"], p["b1"]), 0.0)
        h = jnp.maximum(lin(h, p["w2"], p["b2"]), 0.0)
        h = jnp.maximum(lin(h, p["w3"], p["b3"]), 0.0)
        m = lin(h, p["wm"], p["bm"]).astype(jnp.bfloat16).astype(jnp.float32)
        ls = jnp.clip(lin(h, p["wls"], p["bls"]), LOG_STD_MIN, LOG_STD_MAX)
        ls = ls.astype(jnp.bfloat16).astype(jnp.float32)
        return m, ls

    # Reference 2: full-f32 module semantics (loose tolerance: bf16 weights/output
    # are an intentional inference-time quantization of the PyTorch f32 module).
    def ref_f32(x, p):
        h = jnp.maximum(x @ p["w1"] + p["b1"], 0.0)
        h = jnp.maximum(h @ p["w2"] + p["b2"], 0.0)
        h = jnp.maximum(h @ p["w3"] + p["b3"], 0.0)
        m = h @ p["wm"] + p["bm"]
        ls = jnp.clip(h @ p["wls"] + p["bls"], LOG_STD_MIN, LOG_STD_MAX)
        return m, ls

    m_bf, ls_bf = ref_bf16(state, params)
    m_f32, ls_f32 = ref_f32(state, params)

    assert mean.shape == (batch, action_dim) and log_std.shape == (batch, action_dim)
    assert jnp.allclose(mean, m_bf, atol=5e-3, rtol=5e-3)
    assert jnp.allclose(log_std, ls_bf, atol=5e-3, rtol=5e-3)
    assert jnp.allclose(mean, m_f32, atol=1e-1, rtol=1e-1)
    assert jnp.allclose(log_std, ls_f32, atol=1e-1, rtol=1e-1)

    # TODO(synk): sample() (rsample + tanh squashing + log_prob) needs RNG and is
    # left in host-side JAX; only the deterministic forward() hot path is in Pallas.
    print("KERNEL_OK")
</pallas_src>

<mosaic_0001>
module attributes {stable_mosaic.version = 11 : i64} {
  func.func @gaussian_policy_kernel(%arg0: i32, %arg1: memref<16x128xbf16, #tpu.memory_space<vmem>>, %arg2: memref<128x128xbf16, #tpu.memory_space<vmem>>, %arg3: memref<1x128xf32, #tpu.memory_space<vmem>>, %arg4: memref<128x128xbf16, #tpu.memory_space<vmem>>, %arg5: memref<1x128xf32, #tpu.memory_space<vmem>>, %arg6: memref<128x128xbf16, #tpu.memory_space<vmem>>, %arg7: memref<1x128xf32, #tpu.memory_space<vmem>>, %arg8: memref<128x128xbf16, #tpu.memory_space<vmem>>, %arg9: memref<1x128xf32, #tpu.memory_space<vmem>>, %arg10: memref<1x128xf32, #tpu.memory_space<vmem>>, %arg11: memref<1x128xf32, #tpu.memory_space<vmem>>, %arg12: memref<16x128xbf16, #tpu.memory_space<vmem>>) attributes {dimension_semantics = [#tpu.dimension_semantics<parallel>], iteration_bounds = array<i64: 1>, scalar_prefetch = 0 : i64, scratch_operands = 0 : i64, tpu.core_type = #tpu.core_type<tc>, window_params = [{transform_indices = @transform_0, window_bounds = array<i64: 16, 128>}, {pipeline_mode = #tpu.pipeline_mode<synchronous>, transform_indices = @transform_1, window_bounds = array<i64: 128, 128>}, {pipeline_mode = #tpu.pipeline_mode<synchronous>, transform_indices = @transform_2, window_bounds = array<i64: 1, 128>}, {pipeline_mode = #tpu.pipeline_mode<synchronous>, transform_indices = @transform_3, window_bounds = array<i64: 128, 128>}, {pipeline_mode = #tpu.pipeline_mode<synchronous>, transform_indices = @transform_4, window_bounds = array<i64: 1, 128>}, {pipeline_mode = #tpu.pipeline_mode<synchronous>, transform_indices = @transform_5, window_bounds = array<i64: 128, 128>}, {pipeline_mode = #tpu.pipeline_mode<synchronous>, transform_indices = @transform_6, window_bounds = array<i64: 1, 128>}, {pipeline_mode = #tpu.pipeline_mode<synchronous>, transform_indices = @transform_7, window_bounds = array<i64: 128, 128>}, {pipeline_mode = #tpu.pipeline_mode<synchronous>, transform_indices = @transform_8, window_bounds = array<i64: 1, 128>}, {pipeline_mode = #tpu.pipeline_mode<synchronous>, transform_indices = @transform_9, window_bounds = array<i64: 1, 128>}, {pipeline_mode = #tpu.pipeline_mode<synchronous>, transform_indices = @transform_10, window_bounds = array<i64: 1, 128>}, {transform_indices = @transform_11, window_bounds = array<i64: 16, 128>}]} {
    %c0 = arith.constant 0 : index
    %c0_0 = arith.constant 0 : index
    %0 = vector.load %arg1[%c0, %c0_0] : memref<16x128xbf16, #tpu.memory_space<vmem>>, vector<16x128xbf16>
    %c0_1 = arith.constant 0 : index
    %c0_2 = arith.constant 0 : index
    %1 = vector.load %arg2[%c0_1, %c0_2] : memref<128x128xbf16, #tpu.memory_space<vmem>>, vector<128x128xbf16>
    %cst = arith.constant dense<0.000000e+00> : vector<16x128xf32>
    %2 = tpu.matmul %0, %1, %cst {dimension_numbers = #tpu.dot_dimension_numbers<[1], [0], [0], [1], [0, 0, 1, 1], [], []>} : vector<16x128xbf16>, vector<128x128xbf16>, vector<16x128xf32> -> vector<16x128xf32>
    %c0_3 = arith.constant 0 : index
    %c0_4 = arith.constant 0 : index
    %3 = vector.load %arg3[%c0_3, %c0_4] : memref<1x128xf32, #tpu.memory_space<vmem>>, vector<1x128xf32>
    %4 = vector.broadcast %3 : vector<1x128xf32> to vector<16x128xf32>
    %5 = arith.addf %2, %4 : vector<16x128xf32>
    %cst_5 = arith.constant 0.000000e+00 : f32
    %6 = vector.broadcast %cst_5 : f32 to vector<16x128xf32>
    %7 = arith.maximumf %5, %6 : vector<16x128xf32>
    %8 = arith.truncf %7 : vector<16x128xf32> to vector<16x128xbf16>
    %c0_6 = arith.constant 0 : index
    %c0_7 = arith.constant 0 : index
    %9 = vector.load %arg4[%c0_6, %c0_7] : memref<128x128xbf16, #tpu.memory_space<vmem>>, vector<128x128xbf16>
    %cst_8 = arith.constant dense<0.000000e+00> : vector<16x128xf32>
    %10 = tpu.matmul %8, %9, %cst_8 {dimension_numbers = #tpu.dot_dimension_numbers<[1], [0], [0], [1], [0, 0, 1, 1], [], []>} : vector<16x128xbf16>, vector<128x128xbf16>, vector<16x128xf32> -> vector<16x128xf32>
    %c0_9 = arith.constant 0 : index
    %c0_10 = arith.constant 0 : index
    %11 = vector.load %arg5[%c0_9, %c0_10] : memref<1x128xf32, #tpu.memory_space<vmem>>, vector<1x128xf32>
    %12 = vector.broadcast %11 : vector<1x128xf32> to vector<16x128xf32>
    %13 = arith.addf %10, %12 : vector<16x128xf32>
    %cst_11 = arith.constant 0.000000e+00 : f32
    %14 = vector.broadcast %cst_11 : f32 to vector<16x128xf32>
    %15 = arith.maximumf %13, %14 : vector<16x128xf32>
    %16 = arith.truncf %15 : vector<16x128xf32> to vector<16x128xbf16>
    %c0_12 = arith.constant 0 : index
    %c0_13 = arith.constant 0 : index
    %17 = vector.load %arg6[%c0_12, %c0_13] : memref<128x128xbf16, #tpu.memory_space<vmem>>, vector<128x128xbf16>
    %cst_14 = arith.constant dense<0.000000e+00> : vector<16x128xf32>
    %18 = tpu.matmul %16, %17, %cst_14 {dimension_numbers = #tpu.dot_dimension_numbers<[1], [0], [0], [1], [0, 0, 1, 1], [], []>} : vector<16x128xbf16>, vector<128x128xbf16>, vector<16x128xf32> -> vector<16x128xf32>
    %c0_15 = arith.constant 0 : index
    %c0_16 = arith.constant 0 : index
    %19 = vector.load %arg7[%c0_15, %c0_16] : memref<1x128xf32, #tpu.memory_space<vmem>>, vector<1x128xf32>
    %20 = vector.broadcast %19 : vector<1x128xf32> to vector<16x128xf32>
    %21 = arith.addf %18, %20 : vector<16x128xf32>
    %cst_17 = arith.constant 0.000000e+00 : f32
    %22 = vector.broadcast %cst_17 : f32 to vector<16x128xf32>
    %23 = arith.maximumf %21, %22 : vector<16x128xf32>
    %24 = arith.truncf %23 : vector<16x128xf32> to vector<16x128xbf16>
    %c0_18 = arith.constant 0 : index
    %c0_19 = arith.constant 0 : index
    %25 = vector.load %arg8[%c0_18, %c0_19] : memref<128x128xbf16, #tpu.memory_space<vmem>>, vector<128x128xbf16>
    %cst_20 = arith.constant dense<0.000000e+00> : vector<16x128xf32>
    %26 = tpu.matmul %24, %25, %cst_20 {dimension_numbers = #tpu.dot_dimension_numbers<[1], [0], [0], [1], [0, 0, 1, 1], [], []>} : vector<16x128xbf16>, vector<128x128xbf16>, vector<16x128xf32> -> vector<16x128xf32>
    %c0_21 = arith.constant 0 : index
    %c0_22 = arith.constant 0 : index
    %27 = vector.load %arg9[%c0_21, %c0_22] : memref<1x128xf32, #tpu.memory_space<vmem>>, vector<1x128xf32>
    %28 = vector.broadcast %27 : vector<1x128xf32> to vector<16x128xf32>
    %29 = arith.addf %26, %28 : vector<16x128xf32>
    %c0_23 = arith.constant 0 : index
    %c0_24 = arith.constant 0 : index
    %30 = vector.load %arg10[%c0_23, %c0_24] : memref<1x128xf32, #tpu.memory_space<vmem>>, vector<1x128xf32>
    %31 = vector.broadcast %30 : vector<1x128xf32> to vector<16x128xf32>
    %32 = arith.maximumf %29, %31 : vector<16x128xf32>
    %c0_25 = arith.constant 0 : index
    %c0_26 = arith.constant 0 : index
    %33 = vector.load %arg11[%c0_25, %c0_26] : memref<1x128xf32, #tpu.memory_space<vmem>>, vector<1x128xf32>
    %34 = vector.broadcast %33 : vector<1x128xf32> to vector<16x128xf32>
    %35 = arith.minimumf %32, %34 : vector<16x128xf32>
    %36 = arith.truncf %35 : vector<16x128xf32> to vector<16x128xbf16>
    %c0_27 = arith.constant 0 : index
    %c0_28 = arith.constant 0 : index
    %37 = vector.load %arg12[%c0_27, %c0_28] : memref<16x128xbf16, #tpu.memory_space<vmem>>, vector<16x128xbf16>
    tpu.vector_store %arg12[%c0_27, %c0_28], %36 {strides = array<i32>} : memref<16x128xbf16, #tpu.memory_space<vmem>>, vector<16x128xbf16>,
    return
  }
  func.func @transform_0(%arg0: i32) -> (i32, i32) {
    %c0_i32 = arith.constant 0 : i32
    %c0_i32_0 = arith.constant 0 : i32
    return %arg0, %c0_i32 : i32, i32
  }
  func.func @transform_1(%arg0: i32) -> (i32, i32) {
    %c0_i32 = arith.constant 0 : i32
    %c0_i32_0 = arith.constant 0 : i32
    %c0_i32_1 = arith.constant 0 : i32
    return %c0_i32, %c0_i32_0 : i32, i32
  }
  func.func @transform_2(%arg0: i32) -> (i32, i32) {
    %c0_i32 = arith.constant 0 : i32
    %c0_i32_0 = arith.constant 0 : i32
    %c0_i32_1 = arith.constant 0 : i32
    return %c0_i32, %c0_i32_0 : i32, i32
  }
  func.func @transform_3(%arg0: i32) -> (i32, i32) {
    %c0_i32 = arith.constant 0 : i32
    %c0_i32_0 = arith.constant 0 : i32
    %c0_i32_1 = arith.constant 0 : i32
    return %c0_i32, %c0_i32_0 : i32, i32
  }
  func.func @transform_4(%arg0: i32) -> (i32, i32) {
    %c0_i32 = arith.constant 0 : i32
    %c0_i32_0 = arith.constant 0 : i32
    %c0_i32_1 = arith.constant 0 : i32
    return %c0_i32, %c0_i32_0 : i32, i32
  }
  func.func @transform_5(%arg0: i32) -> (i32, i32) {
    %c0_i32 = arith.constant 0 : i32
    %c0_i32_0 = arith.constant 0 : i32
    %c0_i32_1 = arith.constant 0 : i32
    return %c0_i32, %c0_i32_0 : i32, i32
  }
  func.func @transform_6(%arg0: i32) -> (i32, i32) {
    %c0_i32 = arith.constant 0 : i32
    %c0_i32_0 = arith.constant 0 : i32
    %c0_i32_1 = arith.constant 0 : i32
    return %c0_i32, %c0_i32_0 : i32, i32
  }
  func.func @transform_7(%arg0: i32) -> (i32, i32) {
    %c0_i32 = arith.constant 0 : i32
    %c0_i32_0 = arith.constant 0 : i32
    %c0_i32_1 = arith.constant 0 : i32
    return %c0_i32, %c0_i32_0 : i32, i32
  }
  func.func @transform_8(%arg0: i32) -> (i32, i32) {
    %c0_i32 = arith.constant 0 : i32
    %c0_i32_0 = arith.constant 0 : i32
    %c0_i32_1 = arith.constant 0 : i32
    return %c0_i32, %c0_i32_0 : i32, i32
  }
  func.func @transform_9(%arg0: i32) -> (i32, i32) {
    %c0_i32 = arith.constant 0 : i32
    %c0_i32_0 = arith.constant 0 : i32
    %c0_i32_1 = arith.constant 0 : i32
    return %c0_i32, %c0_i32_0 : i32, i32
  }
  func.func @transform_10(%arg0: i32) -> (i32, i32) {
    %c0_i32 = arith.constant 0 : i32
    %c0_i32_0 = arith.constant 0 : i32
    %c0_i32_1 = arith.constant 0 : i32
    return %c0_i32, %c0_i32_0 : i32, i32
  }
  func.func @transform_11(%arg0: i32) -> (i32, i32) {
    %c0_i32 = arith.constant 0 : i32
    %c0_i32_0 = arith.constant 0 : i32
    return %arg0, %c0_i32 : i32, i32
  }
}

</mosaic_0001>

<llo_original>
// kernel: gaussian_policy_forward.1
$region0: #{gaussian_policy_forward.1}
  #allocation0 [shape = 'u32[]', space=smem, size = 0x4, offset = 0x4, fixed_abs, tag = 'smem constant byte address 0x4 - core index']
  #allocation1 [shape = 'u32[144,128]{1,0:T(1,128)}', space=vmem, size = 0x12000, scoped, tag = 'internal scratch']
  %s0 = inlined_call_operand.vmem [shape: bf16[16,128], index: 0, kind: input, shape index: {}]
  %s1 = inlined_call_operand.hbm [shape: bf16[128,128], index: 1, kind: input, shape index: {}]
  %s2 = inlined_call_operand.vmem [shape: f32[1,128], index: 2, kind: input, shape index: {}]
  %s3 = inlined_call_operand.hbm [shape: bf16[128,128], index: 3, kind: input, shape index: {}]
  %s4 = inlined_call_operand.vmem [shape: f32[1,128], index: 4, kind: input, shape index: {}]
  %s5 = inlined_call_operand.hbm [shape: bf16[128,128], index: 5, kind: input, shape index: {}]
  %s6 = inlined_call_operand.vmem [shape: f32[1,128], index: 6, kind: input, shape index: {}]
  %s7 = inlined_call_operand.hbm [shape: bf16[128,128], index: 7, kind: input, shape index: {}]
  %s8 = inlined_call_operand.vmem [shape: f32[1,128], index: 8, kind: input, shape index: {}]
  %s9 = inlined_call_operand.vmem [shape: f32[1,128], index: 9, kind: input, shape index: {}]
  %s10 = inlined_call_operand.vmem [shape: f32[1,128], index: 10, kind: input, shape index: {}]
  %s11 = inlined_call_operand.vmem [shape: bf16[16,128], index: 11, kind: output, shape index: {}]
  %s12 = sld [smem:[#allocation0]]
  $region70: #{gaussian_policy_forward.1} parent=0
    _
  %s14 = ssub.s32 1, %s12
  %s15 = scalar_select 0, %s14, %s12
  $region1: #{gaussian_policy_forward.1} parent=0
    #allocation2 [shape = 'u8[32768]{0}', space=vmem, size = 0x8000, scoped, tag = 'input window, operand 1, single buffered']
    #allocation3 [shape = 's32[1]{0}', space=sflag, size = 0x4, scoped, tag = 'scoped memory for gaussian_policy_forward.1']
    #allocation4 [shape = 'u8[32768]{0}', space=vmem, size = 0x8000, scoped, tag = 'input window, operand 3, single buffered']
    #allocation5 [shape = 's32[1]{0}', space=sflag, size = 0x4, scoped, tag = 'scoped memory for gaussian_policy_forward.1']
    #allocation6 [shape = 'u8[32768]{0}', space=vmem, size = 0x8000, scoped, tag = 'input window, operand 5, single buffered']
    #allocation7 [shape = 'u8[32768]{0}', space=vmem, size = 0x8000, scoped, tag = 'input window, operand 7, single buffered']
    #allocation8 [shape = 's32[1]{0}', space=sflag, size = 0x4, scoped, tag = 'scoped memory for gaussian_policy_forward.1']
    %16 = vsyncpa [#allocation3], 0
    %17 = vsyncpa [#allocation5], 0
    %18 = vsyncpa [#allocation8], 0
    // Predicated region
    $region2: #{gaussian_policy_forward.1} parent=1 // pred_check
      _
    $region3: #{gaussian_policy_forward.1} parent=1 // pred_check_branch
      %20 = sbr.rel (0) target = $region5
    $region4: #{gaussian_policy_forward.1} parent=1 // pred_region
      _
    $region5: #{gaussian_policy_forward.1} parent=1 // pred_fallthru
      _
    // Predicated region
    $region6: #{gaussian_policy_forward.1} parent=1 // pred_check
      _
    $region7: #{gaussian_policy_forward.1} parent=1 // pred_check_branch
      %22 = sbr.rel (0) target = $region9
    $region8: #{gaussian_policy_forward.1} parent=1 // pred_region
      %s24 = ssub.s32 1024, 1024
      %25 = vsyncadd [#allocation3], %s24
      %s26 = sshll.u32 [#allocation2], 4
      %s27 = int_to_ptr.vmem [resolvable:$true] %s26
      %32 = dma.hbm_to_vmem [thread:$0]  %s1, 1024, %s27, [#allocation3], 64, 64, 4
    $region9: #{gaussian_policy_forward.1} parent=1 // pred_fallthru
      _
    // Predicated region
    $region10: #{gaussian_policy_forward.1} parent=1 // pred_check
      _
    $region11: #{gaussian_policy_forward.1} parent=1 // pred_check_branch
      %34 = sbr.rel (0) target = $region13
    $region12: #{gaussian_policy_forward.1} parent=1 // pred_region
      _
    $region13: #{gaussian_policy_forward.1} parent=1 // pred_fallthru
      _
    // Predicated region
    $region14: #{gaussian_policy_forward.1} parent=1 // pred_check
      _
    $region15: #{gaussian_policy_forward.1} parent=1 // pred_check_branch
      %36 = sbr.rel (0) target = $region17
    $region16: #{gaussian_policy_forward.1} parent=1 // pred_region
      %s38 = ssub.s32 1024, 1024
      %39 = vsyncadd [#allocation5], %s38
      %s40 = sshll.u32 [#allocation4], 4
      %s41 = int_to_ptr.vmem [resolvable:$true] %s40
      %46 = dma.hbm_to_vmem [thread:$0]  %s3, 1024, %s41, [#allocation5], 64, 64, 4
    $region17: #{gaussian_policy_forward.1} parent=1 // pred_fallthru
      _
    // Predicated region
    $region18: #{gaussian_policy_forward.1} parent=1 // pred_check
      _
    $region19: #{gaussian_policy_forward.1} parent=1 // pred_check_branch
      %48 = sbr.rel (0) target = $region21
    $region20: #{gaussian_policy_forward.1} parent=1 // pred_region
      _
    $region21: #{gaussian_policy_forward.1} parent=1 // pred_fallthru
      _
    // Predicated region
    $region22: #{gaussian_policy_forward.1} parent=1 // pred_check
      _
    $region23: #{gaussian_policy_forward.1} parent=1 // pred_check_branch
      %50 = sbr.rel (0) target = $region25
    $region24: #{gaussian_policy_forward.1} parent=1 // pred_region
      %s52 = ssub.s32 1024, 1024
      %53 = vsyncadd [#allocation5], %s52
      %s54 = sshll.u32 [#allocation6], 4
      %s55 = int_to_ptr.vmem [resolvable:$true] %s54
      %60 = dma.hbm_to_vmem [thread:$0]  %s5, 1024, %s55, [#allocation5], 64, 64, 4
    $region25: #{gaussian_policy_forward.1} parent=1 // pred_fallthru
      _
    // Predicated region
    $region26: #{gaussian_policy_forward.1} parent=1 // pred_check
      _
    $region27: #{gaussian_policy_forward.1} parent=1 // pred_check_branch
      %62 = sbr.rel (0) target = $region29
    $region28: #{gaussian_policy_forward.1} parent=1 // pred_region
      _
    $region29: #{gaussian_policy_forward.1} parent=1 // pred_fallthru
      _
    // Predicated region
    $region30: #{gaussian_policy_forward.1} parent=1 // pred_check
      _
    $region31: #{gaussian_policy_forward.1} parent=1 // pred_check_branch
      %64 = sbr.rel (0) target = $region33
    $region32: #{gaussian_policy_forward.1} parent=1 // pred_region
      %s66 = ssub.s32 1024, 1024
      %67 = vsyncadd [#allocation8], %s66
      %s68 = sshll.u32 [#allocation7], 4
      %s69 = int_to_ptr.vmem [resolvable:$true] %s68
      %74 = dma.hbm_to_vmem [thread:$0]  %s7, 1024, %s69, [#allocation8], 64, 64, 4
    $region33: #{gaussian_policy_forward.1} parent=1 // pred_fallthru
      _
    // Predicated region
    $region34: #{gaussian_policy_forward.1} parent=1 // pred_check
      _
    $region35: #{gaussian_policy_forward.1} parent=1 // pred_check_branch
      %76 = sbr.rel (0) target = $region37
    $region36: #{gaussian_policy_forward.1} parent=1 // pred_region
      _
    $region37: #{gaussian_policy_forward.1} parent=1 // pred_fallthru
      _
    // Predicated region
    $region38: #{gaussian_policy_forward.1} parent=1 // pred_check
      _
    $region39: #{gaussian_policy_forward.1} parent=1 // pred_check_branch
      %78 = sbr.rel (0) target = $region41
    $region40: #{gaussian_policy_forward.1} parent=1 // pred_region
      _
    $region41: #{gaussian_policy_forward.1} parent=1 // pred_fallthru
      _
    // Predicated region
    $region42: #{gaussian_policy_forward.1} parent=1 // pred_check
      _
    $region43: #{gaussian_policy_forward.1} parent=1 // pred_check_branch
      %80 = sbr.rel (0) target = $region45
    $region44: #{gaussian_policy_forward.1} parent=1 // pred_region
      _
    $region45: #{gaussian_policy_forward.1} parent=1 // pred_fallthru
      _
    // Predicated region
    $region46: #{gaussian_policy_forward.1} parent=1 // pred_check
      _
    $region47: #{gaussian_policy_forward.1} parent=1 // pred_check_branch
      %82 = sbr.rel (0) target = $region49
    $region48: #{gaussian_policy_forward.1} parent=1 // pred_region
      %83 = dma.done [#allocation3], 1024
    $region49: #{gaussian_policy_forward.1} parent=1 // pred_fallthru
      _
    // Predicated region
    $region50: #{gaussian_policy_forward.1} parent=1 // pred_check
      _
    $region51: #{gaussian_policy_forward.1} parent=1 // pred_check_branch
      %85 = sbr.rel (0) target = $region53
    $region52: #{gaussian_policy_forward.1} parent=1 // pred_region
      %86 = dma.done [#allocation5], 1024
    $region53: #{gaussian_policy_forward.1} parent=1 // pred_fallthru
      _
    // Predicated region
    $region54: #{gaussian_policy_forward.1} parent=1 // pred_check
      _
    $region55: #{gaussian_policy_forward.1} parent=1 // pred_check_branch
      %88 = sbr.rel (0) target = $region57
    $region56: #{gaussian_policy_forward.1} parent=1 // pred_region
      %89 = dma.done [#allocation5], 1024
    $region57: #{gaussian_policy_forward.1} parent=1 // pred_fallthru
      _
    // Predicated region
    $region58: #{gaussian_policy_forward.1} parent=1 // pred_check
      _
    $region59: #{gaussian_policy_forward.1} parent=1 // pred_check_branch
      %91 = sbr.rel (0) target = $region61
    $region60: #{gaussian_policy_forward.1} parent=1 // pred_region
      %92 = dma.done [#allocation8], 1024
    $region61: #{gaussian_policy_forward.1} parent=1 // pred_fallthru
      _
    %v94 = vld [vmem:[%s0] sm:$0xf]
    %v95 = vld [vmem:[%s0 + $0x4] sm:$0xf]
    %v96 = vld [vmem:[#allocation2] sm:$0xf]
    %v97 = vld [vmem:[#allocation2 + $0x4] sm:$0xf]
    %v98 = vld [vmem:[#allocation2 + $0x8] sm:$0xf]
    %v99 = vld [vmem:[#allocation2 + $0xc] sm:$0xf]
    %v100 = vld [vmem:[#allocation2 + $0x10] sm:$0xf]
    %v101 = vld [vmem:[#allocation2 + $0x14] sm:$0xf]
    %v102 = vld [vmem:[#allocation2 + $0x18] sm:$0xf]
    %v103 = vld [vmem:[#allocation2 + $0x1c] sm:$0xf]
    %v104 = vld [vmem:[#allocation2 + $0x20] sm:$0xf]
    %v105 = vld [vmem:[#allocation2 + $0x24] sm:$0xf]
    %v106 = vld [vmem:[#allocation2 + $0x28] sm:$0xf]
    %v107 = vld [vmem:[#allocation2 + $0x2c] sm:$0xf]
    %v108 = vld [vmem:[#allocation2 + $0x30] sm:$0xf]
    %v109 = vld [vmem:[#allocation2 + $0x34] sm:$0xf]
    %v110 = vld [vmem:[#allocation2 + $0x38] sm:$0xf]
    %v111 = vld [vmem:[#allocation2 + $0x3c] sm:$0xf]
    %v112 = vld [vmem:[%s2] sm:$0x1]
    %v114 = vlaneseq
    %v115 = vshrl.u32 %v114, 7
    %v116 = vsub.s32 0, %v115
    %v117 = vrot.slane %v112, %v116
    %v121 = vunpack.c.l.b16 %v94
    %v122 = vunpack.c.l.b16 %v95
    %v123 = vpack.c.b16 %v122, %v121
    %v141 = vunpack.c.l.b16 %v96
    %v142 = vunpack.c.l.b16 %v97
    %v143 = vunpack.c.l.b16 %v98
    %v144 = vunpack.c.l.b16 %v99
    %v145 = vunpack.c.l.b16 %v100
    %v146 = vunpack.c.l.b16 %v101
    %v147 = vunpack.c.l.b16 %v102
    %v148 = vunpack.c.l.b16 %v103
    %v149 = vunpack.c.l.b16 %v104
    %v150 = vunpack.c.l.b16 %v105
    %v151 = vunpack.c.l.b16 %v106
    %v152 = vunpack.c.l.b16 %v107
    %v153 = vunpack.c.l.b16 %v108
    %v154 = vunpack.c.l.b16 %v109
    %v155 = vunpack.c.l.b16 %v110
    %v156 = vunpack.c.l.b16 %v111
    %v157 = vpack.c.b16 %v142, %v141
    %v158 = vpack.c.b16 %v144, %v143
    %v159 = vpack.c.b16 %v146, %v145
    %v160 = vpack.c.b16 %v148, %v147
    %v161 = vpack.c.b16 %v150, %v149
    %v162 = vpack.c.b16 %v152, %v151
    %v163 = vpack.c.b16 %v154, %v153
    %v164 = vpack.c.b16 %v156, %v155
    %173 = vmatprep.subr.bf16.mxu0 0
    %174 = vmatpush1.bf16.msra.mxu0 %v164
    %175 = vmatprep.subr.bf16.mxu0 0
    %176 = vmatpush1.bf16.msra.mxu0 %v163
    %177 = vmatprep.subr.bf16.mxu0 0
    %178 = vmatpush1.bf16.msra.mxu0 %v162
    %179 = vmatprep.subr.bf16.mxu0 0
    %180 = vmatpush1.bf16.msra.mxu0 %v161
    %181 = vmatprep.subr.bf16.mxu0 0
    %182 = vmatpush1.bf16.msra.mxu0 %v160
    %183 = vmatprep.subr.bf16.mxu0 0
    %184 = vmatpush1.bf16.msra.mxu0 %v159
    %185 = vmatprep.subr.bf16.mxu0 0
    %186 = vmatpush1.bf16.msra.mxu0 %v158
    %187 = vmatprep.subr.bf16.mxu0 0
    %188 = vmatpush1.bf16.msra.mxu0 %v157
    %189 = vmatprep.subr.bf16.mxu0 0
    %190 = vmatpush2.bf16.msra.mxu0 0
    %191 = vmatprep.subr.bf16.mxu0 0
    %192 = vmatpush2.bf16.msra.mxu0 0
    %193 = vmatprep.subr.bf16.mxu0 0
    %194 = vmatpush2.bf16.msra.mxu0 0
    %195 = vmatprep.subr.bf16.mxu0 0
    %196 = vmatpush2.bf16.msra.mxu0 0
    %197 = vmatprep.subr.bf16.mxu0 0
    %198 = vmatpush2.bf16.msra.mxu0 0
    %199 = vmatprep.subr.bf16.mxu0 0
    %200 = vmatpush2.bf16.msra.mxu0 0
    %201 = vmatprep.subr.bf16.mxu0 0
    %202 = vmatpush2.bf16.msra.mxu0 0
    %203 = vmatprep.subr.bf16.mxu0 0
    %204 = vmatpush2.bf16.msra.mxu0 0
    %205 = vmatprep.mubr.bf16.mxu0 0
    %206 = vmatmul.mubr.bf16.gmra.mxu0 %v123
    %v207 = vpop.f32.mrf.mxu0
    %v208 = vadd.f32 %v117, %v207
    %v209 = vpop.f32.mrf.mxu0
    %v210 = vpop.f32.mrf.mxu0
    %v211 = vadd.f32 %v117, %v210
    %v212 = vpop.f32.mrf.mxu0
    %213 = vdwg.mxu0
    %v214 = vmax.f32 %v208, 0.0
    %v215 = vmax.f32 %v211, 0.0
    %v216 = vpack.c.bf16 %v215, %v214
    %v217 = vld [vmem:[#allocation4] sm:$0xf]
    %v218 = vld [vmem:[#allocation4 + $0x4] sm:$0xf]
    %v219 = vld [vmem:[#allocation4 + $0x8] sm:$0xf]
    %v220 = vld [vmem:[#allocation4 + $0xc] sm:$0xf]
    %v221 = vld [vmem:[#allocation4 + $0x10] sm:$0xf]
    %v222 = vld [vmem:[#allocation4 + $0x14] sm:$0xf]
    %v223 = vld [vmem:[#allocation4 + $0x18] sm:$0xf]
    %v224 = vld [vmem:[#allocation4 + $0x1c] sm:$0xf]
    %v225 = vld [vmem:[#allocation4 + $0x20] sm:$0xf]
    %v226 = vld [vmem:[#allocation4 + $0x24] sm:$0xf]
    %v227 = vld [vmem:[#allocation4 + $0x28] sm:$0xf]
    %v228 = vld [vmem:[#allocation4 + $0x2c] sm:$0xf]
    %v229 = vld [vmem:[#allocation4 + $0x30] sm:$0xf]
    %v230 = vld [vmem:[#allocation4 + $0x34] sm:$0xf]
    %v231 = vld [vmem:[#allocation4 + $0x38] sm:$0xf]
    %v232 = vld [vmem:[#allocation4 + $0x3c] sm:$0xf]
    %v233 = vld [vmem:[%s4] sm:$0x1]
    %v235 = vlaneseq
    %v236 = vshrl.u32 %v235, 7
    %v237 = vsub.s32 0, %v236
    %v238 = vrot.slane %v233, %v237
    %v256 = vunpack.c.l.b16 %v217
    %v257 = vunpack.c.l.b16 %v218
    %v258 = vunpack.c.l.b16 %v219
    %v259 = vunpack.c.l.b16 %v220
    %v260 = vunpack.c.l.b16 %v221
    %v261 = vunpack.c.l.b16 %v222
    %v262 = vunpack.c.l.b16 %v223
    %v263 = vunpack.c.l.b16 %v224
    %v264 = vunpack.c.l.b16 %v225
    %v265 = vunpack.c.l.b16 %v226
    %v266 = vunpack.c.l.b16 %v227
    %v267 = vunpack.c.l.b16 %v228
    %v268 = vunpack.c.l.b16 %v229
    %v269 = vunpack.c.l.b16 %v230
    %v270 = vunpack.c.l.b16 %v231
    %v271 = vunpack.c.l.b16 %v232
    %v272 = vpack.c.b16 %v257, %v256
    %v273 = vpack.c.b16 %v259, %v258
    %v274 = vpack.c.b16 %v261, %v260
    %v275 = vpack.c.b16 %v263, %v262
    %v276 = vpack.c.b16 %v265, %v264
    %v277 = vpack.c.b16 %v267, %v266
    %v278 = vpack.c.b16 %v269, %v268
    %v279 = vpack.c.b16 %v271, %v270
    %288 = vmatprep.subr.bf16.mxu0 0
    %289 = vmatpush1.bf16.msra.mxu0 %v279
    %290 = vmatprep.subr.bf16.mxu0 0
    %291 = vmatpush1.bf16.msra.mxu0 %v278
    %292 = vmatprep.subr.bf16.mxu0 0
    %293 = vmatpush1.bf16.msra.mxu0 %v277
    %294 = vmatprep.subr.bf16.mxu0 0
    %295 = vmatpush1.bf16.msra.mxu0 %v276
    %296 = vmatprep.subr.bf16.mxu0 0
    %297 = vmatpush1.bf16.msra.mxu0 %v275
    %298 = vmatprep.subr.bf16.mxu0 0
    %299 = vmatpush1.bf16.msra.mxu0 %v274
    %300 = vmatprep.subr.bf16.mxu0 0
    %301 = vmatpush1.bf16.msra.mxu0 %v273
    %302 = vmatprep.subr.bf16.mxu0 0
    %303 = vmatpush1.bf16.msra.mxu0 %v272
    %304 = vmatprep.subr.bf16.mxu0 0
    %305 = vmatpush2.bf16.msra.mxu0 0
    %306 = vmatprep.subr.bf16.mxu0 0
    %307 = vmatpush2.bf16.msra.mxu0 0
    %308 = vmatprep.subr.bf16.mxu0 0
    %309 = vmatpush2.bf16.msra.mxu0 0
    %310 = vmatprep.subr.bf16.mxu0 0
    %311 = vmatpush2.bf16.msra.mxu0 0
    %312 = vmatprep.subr.bf16.mxu0 0
    %313 = vmatpush2.bf16.msra.mxu0 0
    %314 = vmatprep.subr.bf16.mxu0 0
    %315 = vmatpush2.bf16.msra.mxu0 0
    %316 = vmatprep.subr.bf16.mxu0 0
    %317 = vmatpush2.bf16.msra.mxu0 0
    %318 = vmatprep.subr.bf16.mxu0 0
    %319 = vmatpush2.bf16.msra.mxu0 0
    %320 = vmatprep.mubr.bf16.mxu0 0
    %321 = vmatmul.mubr.bf16.gmra.mxu0 %v216
    %v322 = vpop.f32.mrf.mxu0
    %v323 = vadd.f32 %v238, %v322
    %v324 = vpop.f32.mrf.mxu0
    %v325 = vpop.f32.mrf.mxu0
    %v326 = vadd.f32 %v238, %v325
    %v327 = vpop.f32.mrf.mxu0
    %328 = vdwg.mxu0
    %v329 = vmax.f32 %v323, 0.0
    %v330 = vmax.f32 %v326, 0.0
    %v331 = vpack.c.bf16 %v330, %v329
    %v332 = vld [vmem:[#allocation6] sm:$0xf]
    %v333 = vld [vmem:[#allocation6 + $0x4] sm:$0xf]
    %v334 = vld [vmem:[#allocation6 + $0x8] sm:$0xf]
    %v335 = vld [vmem:[#allocation6 + $0xc] sm:$0xf]
    %v336 = vld [vmem:[#allocation6 + $0x10] sm:$0xf]
    %v337 = vld [vmem:[#allocation6 + $0x14] sm:$0xf]
    %v338 = vld [vmem:[#allocation6 + $0x18] sm:$0xf]
    %v339 = vld [vmem:[#allocation6 + $0x1c] sm:$0xf]
    %v340 = vld [vmem:[#allocation6 + $0x20] sm:$0xf]
    %v341 = vld [vmem:[#allocation6 + $0x24] sm:$0xf]
    %v342 = vld [vmem:[#allocation6 + $0x28] sm:$0xf]
    %v343 = vld [vmem:[#allocation6 + $0x2c] sm:$0xf]
    %v344 = vld [vmem:[#allocation6 + $0x30] sm:$0xf]
    %v345 = vld [vmem:[#allocation6 + $0x34] sm:$0xf]
    %v346 = vld [vmem:[#allocation6 + $0x38] sm:$0xf]
    %v347 = vld [vmem:[#allocation6 + $0x3c] sm:$0xf]
    %v348 = vld [vmem:[%s6] sm:$0x1]
    %v350 = vlaneseq
    %v351 = vshrl.u32 %v350, 7
    %v352 = vsub.s32 0, %v351
    %v353 = vrot.slane %v348, %v352
    %v371 = vunpack.c.l.b16 %v332
    %v372 = vunpack.c.l.b16 %v333
    %v373 = vunpack.c.l.b16 %v334
    %v374 = vunpack.c.l.b16 %v335
    %v375 = vunpack.c.l.b16 %v336
    %v376 = vunpack.c.l.b16 %v337
    %v377 = vunpack.c.l.b16 %v338
    %v378 = vunpack.c.l.b16 %v339
    %v379 = vunpack.c.l.b16 %v340
    %v380 = vunpack.c.l.b16 %v341
    %v381 = vunpack.c.l.b16 %v342
    %v382 = vunpack.c.l.b16 %v343
    %v383 = vunpack.c.l.b16 %v344
    %v384 = vunpack.c.l.b16 %v345
    %v385 = vunpack.c.l.b16 %v346
    %v386 = vunpack.c.l.b16 %v347
    %v387 = vpack.c.b16 %v372, %v371
    %v388 = vpack.c.b16 %v374, %v373
    %v389 = vpack.c.b16 %v376, %v375
    %v390 = vpack.c.b16 %v378, %v377
    %v391 = vpack.c.b16 %v380, %v379
    %v392 = vpack.c.b16 %v382, %v381
    %v393 = vpack.c.b16 %v384, %v383
    %v394 = vpack.c.b16 %v386, %v385
    %403 = vmatprep.subr.bf16.mxu0 0
    %404 = vmatpush1.bf16.msra.mxu0 %v394
    %405 = vmatprep.subr.bf16.mxu0 0
    %406 = vmatpush1.bf16.msra.mxu0 %v393
    %407 = vmatprep.subr.bf16.mxu0 0
    %408 = vmatpush1.bf16.msra.mxu0 %v392
    %409 = vmatprep.subr.bf16.mxu0 0
    %410 = vmatpush1.bf16.msra.mxu0 %v391
    %411 = vmatprep.subr.bf16.mxu0 0
    %412 = vmatpush1.bf16.msra.mxu0 %v390
    %413 = vmatprep.subr.bf16.mxu0 0
    %414 = vmatpush1.bf16.msra.mxu0 %v389
    %415 = vmatprep.subr.bf16.mxu0 0
    %416 = vmatpush1.bf16.msra.mxu0 %v388
    %417 = vmatprep.subr.bf16.mxu0 0
    %418 = vmatpush1.bf16.msra.mxu0 %v387
    %419 = vmatprep.subr.bf16.mxu0 0
    %420 = vmatpush2.bf16.msra.mxu0 0
    %421 = vmatprep.subr.bf16.mxu0 0
    %422 = vmatpush2.bf16.msra.mxu0 0
    %423 = vmatprep.subr.bf16.mxu0 0
    %424 = vmatpush2.bf16.msra.mxu0 0
    %425 = vmatprep.subr.bf16.mxu0 0
    %426 = vmatpush2.bf16.msra.mxu0 0
    %427 = vmatprep.subr.bf16.mxu0 0
    %428 = vmatpush2.bf16.msra.mxu0 0
    %429 = vmatprep.subr.bf16.mxu0 0
    %430 = vmatpush2.bf16.msra.mxu0 0
    %431 = vmatprep.subr.bf16.mxu0 0
    %432 = vmatpush2.bf16.msra.mxu0 0
    %433 = vmatprep.subr.bf16.mxu0 0
    %434 = vmatpush2.bf16.msra.mxu0 0
    %435 = vmatprep.mubr.bf16.mxu0 0
    %436 = vmatmul.mubr.bf16.gmra.mxu0 %v331
    %v437 = vpop.f32.mrf.mxu0
    %v438 = vadd.f32 %v353, %v437
    %v439 = vpop.f32.mrf.mxu0
    %v440 = vpop.f32.mrf.mxu0
    %v441 = vadd.f32 %v353, %v440
    %v442 = vpop.f32.mrf.mxu0
    %443 = vdwg.mxu0
    %v444 = vmax.f32 %v438, 0.0
    %v445 = vmax.f32 %v441, 0.0
    %v446 = vpack.c.bf16 %v445, %v444
    %v447 = vld [vmem:[#allocation7] sm:$0xf]
    %v448 = vld [vmem:[#allocation7 + $0x4] sm:$0xf]
    %v449 = vld [vmem:[#allocation7 + $0x8] sm:$0xf]
    %v450 = vld [vmem:[#allocation7 + $0xc] sm:$0xf]
    %v451 = vld [vmem:[#allocation7 + $0x10] sm:$0xf]
    %v452 = vld [vmem:[#allocation7 + $0x14] sm:$0xf]
    %v453 = vld [vmem:[#allocation7 + $0x18] sm:$0xf]
    %v454 = vld [vmem:[#allocation7 + $0x1c] sm:$0xf]
    %v455 = vld [vmem:[#allocation7 + $0x20] sm:$0xf]
    %v456 = vld [vmem:[#allocation7 + $0x24] sm:$0xf]
    %v457 = vld [vmem:[#allocation7 + $0x28] sm:$0xf]
    %v458 = vld [vmem:[#allocation7 + $0x2c] sm:$0xf]
    %v459 = vld [vmem:[#allocation7 + $0x30] sm:$0xf]
    %v460 = vld [vmem:[#allocation7 + $0x34] sm:$0xf]
    %v461 = vld [vmem:[#allocation7 + $0x38] sm:$0xf]
    %v462 = vld [vmem:[#allocation7 + $0x3c] sm:$0xf]
    %v463 = vld [vmem:[%s8] sm:$0x1]
    %v465 = vlaneseq
    %v466 = vshrl.u32 %v465, 7
    %v467 = vsub.s32 0, %v466
    %v468 = vrot.slane %v463, %v467
    %v486 = vunpack.c.l.b16 %v447
    %v487 = vunpack.c.l.b16 %v448
    %v488 = vunpack.c.l.b16 %v449
    %v489 = vunpack.c.l.b16 %v450
    %v490 = vunpack.c.l.b16 %v451
    %v491 = vunpack.c.l.b16 %v452
    %v492 = vunpack.c.l.b16 %v453
    %v493 = vunpack.c.l.b16 %v454
    %v494 = vunpack.c.l.b16 %v455
    %v495 = vunpack.c.l.b16 %v456
    %v496 = vunpack.c.l.b16 %v457
    %v497 = vunpack.c.l.b16 %v458
    %v498 = vunpack.c.l.b16 %v459
    %v499 = vunpack.c.l.b16 %v460
    %v500 = vunpack.c.l.b16 %v461
    %v501 = vunpack.c.l.b16 %v462
    %v502 = vpack.c.b16 %v487, %v486
    %v503 = vpack.c.b16 %v489, %v488
    %v504 = vpack.c.b16 %v491, %v490
    %v505 = vpack.c.b16 %v493, %v492
    %v506 = vpack.c.b16 %v495, %v494
    %v507 = vpack.c.b16 %v497, %v496
    %v508 = vpack.c.b16 %v499, %v498
    %v509 = vpack.c.b16 %v501, %v500
    %518 = vmatprep.subr.bf16.mxu0 0
    %519 = vmatpush1.bf16.msra.mxu0 %v509
    %520 = vmatprep.subr.bf16.mxu0 0
    %521 = vmatpush1.bf16.msra.mxu0 %v508
    %522 = vmatprep.subr.bf16.mxu0 0
    %523 = vmatpush1.bf16.msra.mxu0 %v507
    %524 = vmatprep.subr.bf16.mxu0 0
    %525 = vmatpush1.bf16.msra.mxu0 %v506
    %526 = vmatprep.subr.bf16.mxu0 0
    %527 = vmatpush1.bf16.msra.mxu0 %v505
    %528 = vmatprep.subr.bf16.mxu0 0
    %529 = vmatpush1.bf16.msra.mxu0 %v504
    %530 = vmatprep.subr.bf16.mxu0 0
    %531 = vmatpush1.bf16.msra.mxu0 %v503
    %532 = vmatprep.subr.bf16.mxu0 0
    %533 = vmatpush1.bf16.msra.mxu0 %v502
    %534 = vmatprep.subr.bf16.mxu0 0
    %535 = vmatpush2.bf16.msra.mxu0 0
    %536 = vmatprep.subr.bf16.mxu0 0
    %537 = vmatpush2.bf16.msra.mxu0 0
    %538 = vmatprep.subr.bf16.mxu0 0
    %539 = vmatpush2.bf16.msra.mxu0 0
    %540 = vmatprep.subr.bf16.mxu0 0
    %541 = vmatpush2.bf16.msra.mxu0 0
    %542 = vmatprep.subr.bf16.mxu0 0
    %543 = vmatpush2.bf16.msra.mxu0 0
    %544 = vmatprep.subr.bf16.mxu0 0
    %545 = vmatpush2.bf16.msra.mxu0 0
    %546 = vmatprep.subr.bf16.mxu0 0
    %547 = vmatpush2.bf16.msra.mxu0 0
    %548 = vmatprep.subr.bf16.mxu0 0
    %549 = vmatpush2.bf16.msra.mxu0 0
    %550 = vmatprep.mubr.bf16.mxu0 0
    %551 = vmatmul.mubr.bf16.gmra.mxu0 %v446
    %v552 = vpop.f32.mrf.mxu0
    %v553 = vadd.f32 %v468, %v552
    %v554 = vpop.f32.mrf.mxu0
    %v555 = vpop.f32.mrf.mxu0
    %v556 = vadd.f32 %v468, %v555
    %v557 = vpop.f32.mrf.mxu0
    %558 = vdwg.mxu0
    %v559 = vld [vmem:[%s9] sm:$0x1]
    %v561 = vlaneseq
    %v562 = vshrl.u32 %v561, 7
    %v563 = vsub.s32 0, %v562
    %v564 = vrot.slane %v559, %v563
    %v566 = vmax.f32 %v553, %v564
    %v567 = vmax.f32 %v556, %v564
    %v568 = vld [vmem:[%s10] sm:$0x1]
    %v570 = vlaneseq
    %v571 = vshrl.u32 %v570, 7
    %v572 = vsub.s32 0, %v571
    %v573 = vrot.slane %v568, %v572
    %v575 = vmin.f32 %v566, %v573
    %v576 = vmin.f32 %v567, %v573
    %v577 = vpack.c.bf16 %v576, %v575
    %v579 = vunpack.c.l.b16 %v577
    %v580 = vunpack.c.h.b16 %v577
    %v581 = vpack.c.b16 %v579, %v579
    %v582 = vpack.c.b16 %v580, %v580
    %585 = vst [vmem:[%s11] sm:$0xf] %v581
    %586 = vst [vmem:[%s11 + $0x4] sm:$0xf] %v582
    // Predicated region
    $region62: #{gaussian_policy_forward.1} parent=1 // pred_check
      _
    $region63: #{gaussian_policy_forward.1} parent=1 // pred_check_branch
      %588 = sbr.rel (0) target = $region65
    $region64: #{gaussian_policy_forward.1} parent=1 // pred_region
      _
    $region65: #{gaussian_policy_forward.1} parent=1 // pred_fallthru
      _
    // Predicated region
    $region66: #{gaussian_policy_forward.1} parent=1 // pred_check
      _
    $region67: #{gaussian_policy_forward.1} parent=1 // pred_check_branch
      %590 = sbr.rel (0) target = $region69
    $region68: #{gaussian_policy_forward.1} parent=1 // pred_region
      _
    $region69: #{gaussian_policy_forward.1} parent=1 // pred_fallthru
      _
    %591 = vsyncpa [#allocation3], 1
    %592 = vsyncpa [#allocation5], 1
    %593 = vsyncpa [#allocation8], 1

</llo_original>
